<compile_context>
chip_gen: v5e
topology: v5e:2x2
jax: 0.10.0
libtpu: 0.0.40
codegen_flags: <defaults>
</compile_context>

<pallas_src>
import jax
import jax.numpy as jnp
from jax.experimental import pallas as pl
from jax.experimental.pallas import tpu as pltpu

_LANES = 128
_SUBLANES = 8
_BLOCK_BUDGET_BYTES = 4 * 1024 * 1024   # per streamed x/out block (Pallas double-buffers)
_MAX_LANE_TILE = 2048                   # target lane width for large images
_VMEM_LIMIT_BYTES = 40 * 1024 * 1024    # > v5e 16 MiB scoped default, < v7x 64 MiB physical


def _pick_tiles(rows, hw, itemsize):
    """Choose (row_tile, hw_tile): lane dim is the full extent or a large
    multiple of 128; row dim is as many (n,c) rows as fit the block budget."""
    if hw <= _MAX_LANE_TILE:
        hw_tile = hw                                   # full extent (always legal)
    else:
        hw_tile = (_MAX_LANE_TILE // _LANES) * _LANES  # lane-dense, unmasked stores
    max_rows = max(
        _SUBLANES,
        (_BLOCK_BUDGET_BYTES // (hw_tile * itemsize)) // _SUBLANES * _SUBLANES,
    )
    row_tile = rows if rows <= max_rows else max_rows
    return row_tile, hw_tile


def _make_pool_kernel(hw_total, hw_tile, inv_hw):
    """Per-(n,c) mean over the flattened spatial axis, f32 accumulation."""
    needs_mask = (hw_total % hw_tile) != 0

    def pool_kernel(x_ref, mean_ref):
        # x_ref: (row_tile, hw_tile); mean_ref: (row_tile, 1) f32, resident
        # across the HW-tile ("arbitrary") grid axis.
        t = pl.program_id(1)

        @pl.when(t == 0)
        def _init():
            mean_ref[...] = jnp.zeros_like(mean_ref)

        xs = x_ref[...].astype(jnp.float32)
        if needs_mask:
            lane = jax.lax.broadcasted_iota(jnp.int32, xs.shape, 1)
            xs = jnp.where(t * hw_tile + lane < hw_total, xs, 0.0)
        mean_ref[...] += jnp.sum(xs, axis=1, keepdims=True)

        @pl.when(t == pl.num_programs(1) - 1)
        def _finalize():
            mean_ref[...] = mean_ref[...] * jnp.float32(inv_hw)

    return pool_kernel


def _scale_kernel(x_ref, s_ref, o_ref):
    # x_ref/o_ref: (row_tile, hw_tile); s_ref: (row_tile, 1) in x.dtype.
    # Multiply in the input dtype (keeps bf16 on the v6e/v7x data path).
    o_ref[...] = x_ref[...] * s_ref[...]


@jax.jit
def se_block(x, w1, w2):
    """x: (N, C, H, W) NCHW; w1: (C//r, C); w2: (C, C//r)."""
    N, C, H, W = x.shape
    HW = H * W
    rows = N * C
    xf = x.reshape(rows, HW)

    row_tile, hw_tile = _pick_tiles(rows, HW, x.dtype.itemsize)
    grid_r = pl.cdiv(rows, row_tile)
    grid_hw = pl.cdiv(HW, hw_tile)

    # ---- Pass 1: pooled per-(n,c) means (tiled reduction, f32 accumulation) ----
    pooled = pl.pallas_call(
        _make_pool_kernel(HW, hw_tile, 1.0 / HW),
        out_shape=jax.ShapeDtypeStruct((rows, 1), jnp.float32),
        grid_spec=pltpu.PrefetchScalarGridSpec(
            num_scalar_prefetch=0,
            grid=(grid_r, grid_hw),
            in_specs=[pl.BlockSpec((row_tile, hw_tile), lambda r, t: (r, t))],
            out_specs=pl.BlockSpec((row_tile, 1), lambda r, t: (r, 0)),
        ),
        compiler_params=pltpu.CompilerParams(
            dimension_semantics=("parallel", "arbitrary"),
            vmem_limit_bytes=_VMEM_LIMIT_BYTES),
    )(xf)

    # ---- Tiny squeeze-excite MLP on the pooled (N, C): one batched matmul
    # per 1x1 conv in plain XLA (no degenerate single-column MXU work in-kernel).
    m = pooled.reshape(N, C)
    h = jnp.maximum(
        jnp.dot(m, w1.astype(jnp.float32).T, preferred_element_type=jnp.float32),
        0.0)
    s = jax.nn.sigmoid(
        jnp.dot(h, w2.astype(jnp.float32).T, preferred_element_type=jnp.float32))
    s = s.astype(x.dtype).reshape(rows, 1)

    # ---- Pass 2: pure streaming per-channel scale, lane-dense blocks ----
    out = pl.pallas_call(
        _scale_kernel,
        out_shape=jax.ShapeDtypeStruct((rows, HW), x.dtype),
        grid_spec=pltpu.PrefetchScalarGridSpec(
            num_scalar_prefetch=0,
            grid=(grid_r, grid_hw),
            in_specs=[
                pl.BlockSpec((row_tile, hw_tile), lambda r, t: (r, t)),
                pl.BlockSpec((row_tile, 1), lambda r, t: (r, 0)),
            ],
            out_specs=pl.BlockSpec((row_tile, hw_tile), lambda r, t: (r, t)),
        ),
        compiler_params=pltpu.CompilerParams(
            dimension_semantics=("parallel", "parallel"),
            vmem_limit_bytes=_VMEM_LIMIT_BYTES),
    )(xf, s)

    return out.reshape(N, C, H, W)


def se_block_ref(x, w1, w2):
    """Pure-JAX reference mirroring the PyTorch forward."""
    m = jnp.mean(x, axis=(2, 3), keepdims=True)                 # (N,C,1,1)
    h = jax.nn.relu(jnp.einsum("oc,ncij->noij", w1, m))         # conv1 1x1
    s = jax.nn.sigmoid(jnp.einsum("oc,ncij->noij", w2, h))      # conv2 1x1
    return x * s


if __name__ == "__main__":
    # Small shapes consistent with the module: in_channels=16, reduction=8.
    N, C, H, W = 2, 16, 16, 16          # HW = 256 -> lane-dense even at toy size
    reduction = 8
    Cr = C // reduction

    key = jax.random.PRNGKey(0)
    kx, k1, k2 = jax.random.split(key, 3)

    x = jax.random.normal(kx, (N, C, H, W), dtype=jnp.float32)
    # 1x1 conv weights (no bias), stored squeezed as (out_ch, in_ch)
    w1 = jax.random.normal(k1, (Cr, C), dtype=jnp.float32) * 0.1
    w2 = jax.random.normal(k2, (C, Cr), dtype=jnp.float32) * 0.1

    out = jax.block_until_ready(se_block(x, w1, w2))
    ref = se_block_ref(x, w1, w2)

    assert out.shape == (N, C, H, W)
    assert jnp.allclose(out, ref, atol=1e-5, rtol=1e-5), "mismatch vs reference"

    print("KERNEL_OK")
</pallas_src>

<mosaic_0001>
module attributes {stable_mosaic.version = 11 : i64} {
  func.func @pool_kernel(%arg0: i32, %arg1: i32, %arg2: memref<32x256xf32, #tpu.memory_space<vmem>>, %arg3: memref<32x1xf32, #tpu.memory_space<vmem>>) attributes {dimension_semantics = [#tpu.dimension_semantics<parallel>, #tpu.dimension_semantics<arbitrary>], iteration_bounds = array<i64: 1, 1>, scalar_prefetch = 0 : i64, scratch_operands = 0 : i64, tpu.core_type = #tpu.core_type<tc>, window_params = [{transform_indices = @transform_0, window_bounds = array<i64: 32, 256>}, {transform_indices = @transform_1, window_bounds = array<i64: 32, 1>}]} {
    %c0_i32 = arith.constant 0 : i32
    %0 = arith.cmpi eq, %arg1, %c0_i32 : i32
    %1 = arith.extui %0 : i1 to i32
    %c0_i32_0 = arith.constant 0 : i32
    %2 = arith.cmpi ne, %1, %c0_i32_0 : i32
    scf.if %2 {
      %cst_8 = arith.constant 0.000000e+00 : f32
      %12 = vector.broadcast %cst_8 : f32 to vector<32x1xf32>
      %c0_9 = arith.constant 0 : index
      %c0_10 = arith.constant 0 : index
      %13 = vector.load %arg3[%c0_9, %c0_10] : memref<32x1xf32, #tpu.memory_space<vmem>>, vector<32x1xf32>
      tpu.vector_store %arg3[%c0_9, %c0_10], %12 {strides = array<i32>} : memref<32x1xf32, #tpu.memory_space<vmem>>, vector<32x1xf32>,
    } else {
    }
    %c0 = arith.constant 0 : index
    %c0_1 = arith.constant 0 : index
    %3 = vector.load %arg2[%c0, %c0_1] : memref<32x256xf32, #tpu.memory_space<vmem>>, vector<32x256xf32>
    %c0_2 = arith.constant 0 : index
    %c0_3 = arith.constant 0 : index
    %4 = vector.load %arg3[%c0_2, %c0_3] : memref<32x1xf32, #tpu.memory_space<vmem>>, vector<32x1xf32>
    %cst = arith.constant dense<0.000000e+00> : vector<32xf32>
    %5 = vector.multi_reduction <add>, %3, %cst [1] : vector<32x256xf32> to vector<32xf32>
    %6 = vector.shape_cast %5 : vector<32xf32> to vector<32x1xf32>
    %7 = arith.addf %4, %6 : vector<32x1xf32>
    %c0_4 = arith.constant 0 : index
    %c0_5 = arith.constant 0 : index
    %8 = vector.load %arg3[%c0_4, %c0_5] : memref<32x1xf32, #tpu.memory_space<vmem>>, vector<32x1xf32>
    tpu.vector_store %arg3[%c0_4, %c0_5], %7 {strides = array<i32>} : memref<32x1xf32, #tpu.memory_space<vmem>>, vector<32x1xf32>,
    %c0_i32_6 = arith.constant 0 : i32
    %9 = arith.cmpi eq, %arg1, %c0_i32_6 : i32
    %10 = arith.extui %9 : i1 to i32
    %c0_i32_7 = arith.constant 0 : i32
    %11 = arith.cmpi ne, %10, %c0_i32_7 : i32
    scf.if %11 {
      %c0_8 = arith.constant 0 : index
      %c0_9 = arith.constant 0 : index
      %12 = vector.load %arg3[%c0_8, %c0_9] : memref<32x1xf32, #tpu.memory_space<vmem>>, vector<32x1xf32>
      %cst_10 = arith.constant 3.906250e-03 : f32
      %13 = vector.broadcast %cst_10 : f32 to vector<32x1xf32>
      %14 = arith.mulf %12, %13 : vector<32x1xf32>
      %c0_11 = arith.constant 0 : index
      %c0_12 = arith.constant 0 : index
      %15 = vector.load %arg3[%c0_11, %c0_12] : memref<32x1xf32, #tpu.memory_space<vmem>>, vector<32x1xf32>
      tpu.vector_store %arg3[%c0_11, %c0_12], %14 {strides = array<i32>} : memref<32x1xf32, #tpu.memory_space<vmem>>, vector<32x1xf32>,
    } else {
    }
    return
  }
  func.func @transform_0(%arg0: i32, %arg1: i32) -> (i32, i32) {
    %c0_i32 = arith.constant 0 : i32
    return %arg0, %arg1 : i32, i32
  }
  func.func @transform_1(%arg0: i32, %arg1: i32) -> (i32, i32) {
    %c0_i32 = arith.constant 0 : i32
    %c0_i32_0 = arith.constant 0 : i32
    return %arg0, %c0_i32 : i32, i32
  }
}

module attributes {stable_mosaic.version = 11 : i64} {
  func.func @_scale_kernel(%arg0: i32, %arg1: i32, %arg2: memref<32x256xf32, #tpu.memory_space<vmem>>, %arg3: memref<32x1xf32, #tpu.memory_space<vmem>>, %arg4: memref<32x256xf32, #tpu.memory_space<vmem>>) attributes {dimension_semantics = [#tpu.dimension_semantics<parallel>, #tpu.dimension_semantics<parallel>], iteration_bounds = array<i64: 1, 1>, scalar_prefetch = 0 : i64, scratch_operands = 0 : i64, tpu.core_type = #tpu.core_type<tc>, window_params = [{transform_indices = @transform_0, window_bounds = array<i64: 32, 256>}, {transform_indices = @transform_1, window_bounds = array<i64: 32, 1>}, {transform_indices = @transform_2, window_bounds = array<i64: 32, 256>}]} {
    %c0 = arith.constant 0 : index
    %c0_0 = arith.constant 0 : index
    %0 = vector.load %arg2[%c0, %c0_0] : memref<32x256xf32, #tpu.memory_space<vmem>>, vector<32x256xf32>
    %c0_1 = arith.constant 0 : index
    %c0_2 = arith.constant 0 : index
    %1 = vector.load %arg3[%c0_1, %c0_2] : memref<32x1xf32, #tpu.memory_space<vmem>>, vector<32x1xf32>
    %2 = vector.broadcast %1 : vector<32x1xf32> to vector<32x256xf32>
    %3 = arith.mulf %0, %2 : vector<32x256xf32>
    %c0_3 = arith.constant 0 : index
    %c0_4 = arith.constant 0 : index
    %4 = vector.load %arg4[%c0_3, %c0_4] : memref<32x256xf32, #tpu.memory_space<vmem>>, vector<32x256xf32>
    tpu.vector_store %arg4[%c0_3, %c0_4], %3 {strides = array<i32>} : memref<32x256xf32, #tpu.memory_space<vmem>>, vector<32x256xf32>,
    return
  }
  func.func @transform_0(%arg0: i32, %arg1: i32) -> (i32, i32) {
    %c0_i32 = arith.constant 0 : i32
    return %arg0, %arg1 : i32, i32
  }
  func.func @transform_1(%arg0: i32, %arg1: i32) -> (i32, i32) {
    %c0_i32 = arith.constant 0 : i32
    %c0_i32_0 = arith.constant 0 : i32
    return %arg0, %c0_i32 : i32, i32
  }
  func.func @transform_2(%arg0: i32, %arg1: i32) -> (i32, i32) {
    %c0_i32 = arith.constant 0 : i32
    return %arg0, %arg1 : i32, i32
  }
}

</mosaic_0001>

<llo_original>
// kernel: se_block.2
$region0: #{se_block.2}
  #allocation0 [shape = 'u32[]', space=smem, size = 0x4, offset = 0x4, fixed_abs, tag = 'smem constant byte address 0x4 - core index']
  #allocation1 [shape = 'u32[72,128]{1,0:T(1,128)}', space=vmem, size = 0x9000, scoped, tag = 'internal scratch']
  %s0 = inlined_call_operand.vmem [shape: f32[32,256], index: 0, kind: input, shape index: {}]
  %s1 = inlined_call_operand.vmem [shape: f32[32,1], index: 1, kind: output, shape index: {}]
  %s2 = sld [smem:[#allocation0]]
  $region22: #{se_block.2} parent=0
    _
  %s4 = ssub.s32 1, %s2
  %s5 = scalar_select 0, %s4, %s2
  // Predicated region
  $region2: #{se_block.2} parent=0 // pred_check
    _
  $region3: #{se_block.2} parent=0 // pred_check_branch
    %7 = sbr.rel (0) target = $region5
  $region4: #{se_block.2} parent=0 // pred_region
    _
  $region5: #{se_block.2} parent=0 // pred_fallthru
    _
  %p8 = scmp.eq.s32.totalorder 0, 0
  // Predicated region
  $region6: #{se_block.2} parent=0 // pred_check
    %p9 = pneg %p8
  $region7: #{se_block.2} parent=0 // pred_check_branch
    %11 = sbr.rel (%p9) target = $region9
  $region8: #{se_block.2} parent=0 // pred_region
    %vm12 = vcmask 7168
    %13 = vst.msk [vmem:[%s1] sm:$0xff] %vm12, 0.0
    %14 = vst.msk [vmem:[%s1 + $0x8] sm:$0xff] %vm12, 0.0
    %15 = vst.msk [vmem:[%s1 + $0x10] sm:$0xff] %vm12, 0.0
    %16 = vst.msk [vmem:[%s1 + $0x18] sm:$0xff] %vm12, 0.0
  $region9: #{se_block.2} parent=0 // pred_fallthru
    _
  %v17 = vld [vmem:[%s0] sm:$0xff]
  %v18 = vld [vmem:[%s0 + $0x8] sm:$0xff]
  %v19 = vld [vmem:[%s0 + $0x10] sm:$0xff]
  %v20 = vld [vmem:[%s0 + $0x18] sm:$0xff]
  %v21 = vld [vmem:[%s0 + $0x20] sm:$0xff]
  %v22 = vld [vmem:[%s0 + $0x28] sm:$0xff]
  %v23 = vld [vmem:[%s0 + $0x30] sm:$0xff]
  %v24 = vld [vmem:[%s0 + $0x38] sm:$0xff]
  %v25 = vld [vmem:[%s1] sm:$0xff]
  %v26 = vld [vmem:[%s1 + $0x8] sm:$0xff]
  %v27 = vld [vmem:[%s1 + $0x10] sm:$0xff]
  %v28 = vld [vmem:[%s1 + $0x18] sm:$0xff]
  %v29 = vadd.f32 %v17, %v18
  %30 = vadd.xlane.f32.xlu0 %v29
  %v31 = vpop.xlane.xlu0 %30
  %v32 = vadd.f32 %v19, %v20
  %33 = vadd.xlane.f32.xlu0 %v32
  %v34 = vpop.xlane.xlu0 %33
  %v35 = vadd.f32 %v21, %v22
  %36 = vadd.xlane.f32.xlu0 %v35
  %v37 = vpop.xlane.xlu0 %36
  %v38 = vadd.f32 %v23, %v24
  %39 = vadd.xlane.f32.xlu0 %v38
  %v40 = vpop.xlane.xlu0 %39
  %v41 = vadd.f32 %v25, %v31
  %v42 = vadd.f32 %v26, %v34
  %v43 = vadd.f32 %v27, %v37
  %v44 = vadd.f32 %v28, %v40
  %vm45 = vcmask 7168
  %46 = vst.msk [vmem:[%s1] sm:$0xff] %vm45, %v41
  %47 = vst.msk [vmem:[%s1 + $0x8] sm:$0xff] %vm45, %v42
  %48 = vst.msk [vmem:[%s1 + $0x10] sm:$0xff] %vm45, %v43
  %49 = vst.msk [vmem:[%s1 + $0x18] sm:$0xff] %vm45, %v44
  // Predicated region
  $region10: #{se_block.2} parent=0 // pred_check
    %p50 = pneg %p8
  $region11: #{se_block.2} parent=0 // pred_check_branch
    %52 = sbr.rel (%p50) target = $region13
  $region12: #{se_block.2} parent=0 // pred_region
    %v53 = vld [vmem:[%s1] sm:$0xff]
    %v54 = vld [vmem:[%s1 + $0x8] sm:$0xff]
    %v55 = vld [vmem:[%s1 + $0x10] sm:$0xff]
    %v56 = vld [vmem:[%s1 + $0x18] sm:$0xff]
    %v57 = vmul.f32 %v53, 0.00390625
    %v58 = vmul.f32 %v54, 0.00390625
    %v59 = vmul.f32 %v55, 0.00390625
    %v60 = vmul.f32 %v56, 0.00390625
    %61 = vst.msk [vmem:[%s1] sm:$0xff] %vm45, %v57
    %62 = vst.msk [vmem:[%s1 + $0x8] sm:$0xff] %vm45, %v58
    %63 = vst.msk [vmem:[%s1 + $0x10] sm:$0xff] %vm45, %v59
    %64 = vst.msk [vmem:[%s1 + $0x18] sm:$0xff] %vm45, %v60
  $region13: #{se_block.2} parent=0 // pred_fallthru
    _
  // Predicated region
  $region14: #{se_block.2} parent=0 // pred_check
    _
  $region15: #{se_block.2} parent=0 // pred_check_branch
    %66 = sbr.rel (0) target = $region17
  $region16: #{se_block.2} parent=0 // pred_region
    _
  $region17: #{se_block.2} parent=0 // pred_fallthru
    _
  // Predicated region
  $region18: #{se_block.2} parent=0 // pred_check
    _
  $region19: #{se_block.2} parent=0 // pred_check_branch
    %68 = sbr.rel (0) target = $region21
  $region20: #{se_block.2} parent=0 // pred_region
    _
  $region21: #{se_block.2} parent=0 // pred_fallthru
    _

// kernel: se_block.3
$region0: #{se_block.3}
  #allocation0 [shape = 'u32[]', space=smem, size = 0x4, offset = 0x4, fixed_abs, tag = 'smem constant byte address 0x4 - core index']
  #allocation1 [shape = 'u32[72,128]{1,0:T(1,128)}', space=vmem, size = 0x9000, scoped, tag = 'internal scratch']
  %s0 = inlined_call_operand.vmem [shape: f32[32,256], index: 0, kind: input, shape index: {}]
  %s1 = inlined_call_operand.vmem [shape: f32[32,1], index: 1, kind: input, shape index: {}]
  %s2 = inlined_call_operand.vmem [shape: f32[32,256], index: 2, kind: output, shape index: {}]
  %s3 = sld [smem:[#allocation0]]
  $region18: #{se_block.3} parent=0
    _
  %s5 = ssub.s32 1, %s3
  %s6 = scalar_select 0, %s5, %s3
  // Predicated region
  $region2: #{se_block.3} parent=0 // pred_check
    _
  $region3: #{se_block.3} parent=0 // pred_check_branch
    %8 = sbr.rel (0) target = $region5
  $region4: #{se_block.3} parent=0 // pred_region
    _
  $region5: #{se_block.3} parent=0 // pred_fallthru
    _
  // Predicated region
  $region6: #{se_block.3} parent=0 // pred_check
    _
  $region7: #{se_block.3} parent=0 // pred_check_branch
    %10 = sbr.rel (0) target = $region9
  $region8: #{se_block.3} parent=0 // pred_region
    _
  $region9: #{se_block.3} parent=0 // pred_fallthru
    _
  %v11 = vld [vmem:[%s0] sm:$0xff]
  %v12 = vld [vmem:[%s0 + $0x8] sm:$0xff]
  %v13 = vld [vmem:[%s0 + $0x10] sm:$0xff]
  %v14 = vld [vmem:[%s0 + $0x18] sm:$0xff]
  %v15 = vld [vmem:[%s0 + $0x20] sm:$0xff]
  %v16 = vld [vmem:[%s0 + $0x28] sm:$0xff]
  %v17 = vld [vmem:[%s0 + $0x30] sm:$0xff]
  %v18 = vld [vmem:[%s0 + $0x38] sm:$0xff]
  %v19 = vld [vmem:[%s1] sm:$0xff]
  %v20 = vld [vmem:[%s1 + $0x8] sm:$0xff]
  %v21 = vld [vmem:[%s1 + $0x10] sm:$0xff]
  %v22 = vld [vmem:[%s1 + $0x18] sm:$0xff]
  %24 = vset.pattern.permute.xlu0 0
  %25 = vperm.xlu0 %24, %v19
  %v26 = vpop.permute.xlu0 %25
  %29 = vset.pattern.permute.xlu0 0
  %30 = vperm.xlu0 %29, %v20
  %v31 = vpop.permute.xlu0 %30
  %34 = vset.pattern.permute.xlu0 0
  %35 = vperm.xlu0 %34, %v21
  %v36 = vpop.permute.xlu0 %35
  %39 = vset.pattern.permute.xlu0 0
  %40 = vperm.xlu0 %39, %v22
  %v41 = vpop.permute.xlu0 %40
  %v43 = vmul.f32 %v11, %v26
  %v44 = vmul.f32 %v12, %v26
  %v45 = vmul.f32 %v13, %v31
  %v46 = vmul.f32 %v14, %v31
  %v47 = vmul.f32 %v15, %v36
  %v48 = vmul.f32 %v16, %v36
  %v49 = vmul.f32 %v17, %v41
  %v50 = vmul.f32 %v18, %v41
  %51 = vst [vmem:[%s2] sm:$0xff] %v43
  %52 = vst [vmem:[%s2 + $0x8] sm:$0xff] %v44
  %53 = vst [vmem:[%s2 + $0x10] sm:$0xff] %v45
  %54 = vst [vmem:[%s2 + $0x18] sm:$0xff] %v46
  %55 = vst [vmem:[%s2 + $0x20] sm:$0xff] %v47
  %56 = vst [vmem:[%s2 + $0x28] sm:$0xff] %v48
  %57 = vst [vmem:[%s2 + $0x30] sm:$0xff] %v49
  %58 = vst [vmem:[%s2 + $0x38] sm:$0xff] %v50
  // Predicated region
  $region10: #{se_block.3} parent=0 // pred_check
    _
  $region11: #{se_block.3} parent=0 // pred_check_branch
    %60 = sbr.rel (0) target = $region13
  $region12: #{se_block.3} parent=0 // pred_region
    _
  $region13: #{se_block.3} parent=0 // pred_fallthru
    _
  // Predicated region
  $region14: #{se_block.3} parent=0 // pred_check
    _
  $region15: #{se_block.3} parent=0 // pred_check_branch
    %62 = sbr.rel (0) target = $region17
  $region16: #{se_block.3} parent=0 // pred_region
    _
  $region17: #{se_block.3} parent=0 // pred_fallthru
    _

</llo_original>
